<compile_context>
chip_gen: v6e
topology: v6e:2x2x1
jax: 0.10.0
libtpu: 0.0.40
codegen_flags: <defaults>
</compile_context>

<pallas_src>
import functools

import jax
import jax.numpy as jnp
from jax.experimental import pallas as pl
from jax.experimental.pallas import tpu as pltpu


# --------------------------- pe table construction ---------------------------
def make_pe(dim: int, h_max: int, w_max: int, dtype=jnp.float32) -> jnp.ndarray:
    """Replicates the PyTorch __init__ pe construction. Returns (1, h_max, w_max, dim)."""
    assert dim % 4 == 0, "PositionalEncoding2D requires dim % 4 == 0"

    div = jnp.exp(-jnp.arange(0.0, dim // 2, 2.0) / dim * jnp.log(10000.0))[:, None]
    h_pos = jnp.arange(0.0, h_max)
    w_pos = jnp.arange(0.0, w_max)

    sin_h = jnp.sin(h_pos * div)   # (n, h_max)
    cos_h = jnp.cos(h_pos * div)
    sin_w = jnp.sin(w_pos * div)   # (n, w_max)
    cos_w = jnp.cos(w_pos * div)

    n = div.shape[0]
    pe = jnp.zeros((1, dim, h_max, w_max), dtype=jnp.float32)
    pe = pe.at[:, 0:dim // 2:2, :, :].set(
        jnp.broadcast_to(sin_h[None, :, :, None], (1, n, h_max, w_max)))
    pe = pe.at[:, 1:dim // 2:2, :, :].set(
        jnp.broadcast_to(cos_h[None, :, :, None], (1, n, h_max, w_max)))
    pe = pe.at[:, dim // 2::2, :, :].set(
        jnp.broadcast_to(sin_w[None, :, None, :], (1, n, h_max, w_max)))
    pe = pe.at[:, dim // 2 + 1::2, :, :].set(
        jnp.broadcast_to(cos_w[None, :, None, :], (1, n, h_max, w_max)))

    # permute (1, C, H, W) -> (1, H, W, C)
    return jnp.transpose(pe, (0, 2, 3, 1)).astype(dtype)


# --------------------------- layout / tiling helpers -------------------------
def _lane_layout(H: int, W: int, C: int):
    """Lane-dense 3D layout (rows, lane) for the (H, W, C) tail."""
    if (W * C) % 128 == 0:
        return H, W * C
    # Lane width off 128: collapse all spatial dims into one wide lane axis so
    # stores stay dense instead of masked partial stores.
    return 1, H * W * C


def prepare_pe(pe: jnp.ndarray, H: int, W: int, dtype) -> jnp.ndarray:
    """One-time (outside the hot path): slice pe to (H, W), cast to the
    activation dtype, and reshape to the lane-dense slab the kernel consumes.
    Returns (1, rows, lane)."""
    C = pe.shape[-1]
    rows, lane = _lane_layout(H, W, C)
    return pe[:, :H, :W, :].astype(dtype).reshape(1, rows, lane)


def _vmem_limit_bytes() -> int:
    """Generation-aware scoped-VMEM cap: half of physical, clamped to [16, 64] MiB
    (v7x has only 64 MiB per TensorCore, so never copy a v6e-sized config)."""
    try:
        cap = int(getattr(pltpu.get_tpu_info(), "vmem_capacity_bytes", 128 << 20))
    except Exception:
        cap = 128 << 20
    return int(min(64 << 20, max(16 << 20, cap // 2)))


def _choose_tile_rows(rows: int, b_in_block: int, lane: int, itemsize: int,
                      budget_bytes: int) -> int:
    """Largest row tile whose single-tile footprint fits the budget.
    Dtype-aware sublane alignment (8 rows for f32, 16 for bf16, 32 for int8).
    Prefers divisors of `rows`; otherwise uses cdiv tiling (padded tail block,
    safe for this elementwise add)."""
    bytes_per_row = b_in_block * lane * itemsize
    if rows * bytes_per_row <= budget_bytes:
        return rows
    sub = max(1, 32 // itemsize)
    if rows <= sub:
        return rows
    max_rows = (budget_bytes // bytes_per_row) // sub * sub
    max_rows = max(sub, min(max_rows, rows))
    for d in range(max_rows, 0, -sub):          # multiples of `sub`, descending
        if rows % d == 0:
            return d
    return max_rows                              # cdiv tiling fallback


# --------------------------------- kernel ------------------------------------
def _add_pe_kernel(x_ref, pe_ref, o_ref):
    # x_ref/o_ref: (b, tile_rows, lane); pe_ref: (1, tile_rows, lane).
    # Broadcast over the leading axis; pure VPU add, HBM-bandwidth bound.
    o_ref[...] = (x_ref[...] + pe_ref[...]).astype(o_ref.dtype)


_SMALL_INPUT_BYTES = 1 << 20   # below this, a fused XLA add beats any custom call


@functools.partial(jax.jit, static_argnames=("force_pallas",))
def positional_encoding_2d(x: jnp.ndarray, pe3: jnp.ndarray, *,
                           force_pallas: bool = False) -> jnp.ndarray:
    """
    x:   (B, H, W, C) activations
    pe3: lane-dense pe slab from prepare_pe(pe, H, W, x.dtype), shape (1, rows, lane)
    returns x + pe[:, :H, :W]   (broadcast over batch)

    NOTE: x is NOT aliased/donated; callers that can donate x should add
    donate_argnums at their own jit boundary.
    """
    B, H, W, C = x.shape
    rows, lane = _lane_layout(H, W, C)
    assert pe3.shape == (1, rows, lane), "pe3 must come from prepare_pe(pe, H, W, x.dtype)"

    itemsize = jnp.dtype(x.dtype).itemsize
    total_bytes = B * H * W * C * itemsize

    if (not force_pallas) and total_bytes < _SMALL_INPUT_BYTES:
        # Tiny activation: custom-call + pipeline overhead dominates -> plain XLA.
        return x + pe3.reshape(1, H, W, C).astype(x.dtype)

    x3 = x.reshape(B, rows, lane)                 # free: contiguous reshape

    vmem_limit = _vmem_limit_bytes()
    tile_budget = min(4 << 20, vmem_limit // 12)  # ~6 double-buffered tiles + headroom

    sub = max(1, 32 // itemsize)
    min_rows = min(rows, sub)
    fold_batch = B * min_rows * lane * itemsize <= tile_budget

    if fold_batch:
        # Whole batch in one block: B x fewer grid steps, pe fetched once per row tile.
        tile_rows = _choose_tile_rows(rows, B, lane, itemsize, tile_budget)
        grid = (pl.cdiv(rows, tile_rows),)
        x_spec = pl.BlockSpec((B, tile_rows, lane), lambda i: (0, i, 0))
        pe_spec = pl.BlockSpec((1, tile_rows, lane), lambda i: (0, i, 0))
        out_spec = pl.BlockSpec((B, tile_rows, lane), lambda i: (0, i, 0))
        semantics = ("parallel",)
    else:
        # Batch too large to fold: row tiles outer, batch inner so the pe block
        # index is constant across consecutive batch steps (stays resident).
        tile_rows = _choose_tile_rows(rows, 1, lane, itemsize, tile_budget)
        grid = (pl.cdiv(rows, tile_rows), B)
        x_spec = pl.BlockSpec((1, tile_rows, lane), lambda i, b: (b, i, 0))
        pe_spec = pl.BlockSpec((1, tile_rows, lane), lambda i, b: (0, i, 0))
        out_spec = pl.BlockSpec((1, tile_rows, lane), lambda i, b: (b, i, 0))
        semantics = ("parallel", "parallel")

    out3 = pl.pallas_call(
        _add_pe_kernel,
        out_shape=jax.ShapeDtypeStruct((B, rows, lane), x.dtype),
        grid_spec=pltpu.PrefetchScalarGridSpec(
            num_scalar_prefetch=0,
            grid=grid,
            in_specs=[x_spec, pe_spec],
            out_specs=out_spec,
        ),
        compiler_params=pltpu.CompilerParams(
            dimension_semantics=semantics,
            vmem_limit_bytes=vmem_limit,
        ),
        # No input_output_aliases: without donation XLA would insert a
        # defensive full copy of x to satisfy the alias (extra HBM traffic).
    )(x3, pe3)

    return out3.reshape(B, H, W, C)


# ----------------------------------- demo ------------------------------------
if __name__ == "__main__":
    # Small shapes consistent with the module's forward: x is (B, H, W, C).
    B, H, W = 2, 16, 16
    dim, h_max, w_max = 32, 32, 32        # module init args (dim divisible by 4)

    key = jax.random.PRNGKey(0)
    x = jax.random.normal(key, (B, H, W, dim), dtype=jnp.float32)

    pe = make_pe(dim, h_max, w_max)       # frozen parameter, (1, h_max, w_max, dim)
    pe3 = prepare_pe(pe, H, W, x.dtype)   # one-time lane-dense slab, (1, H, W*dim)

    # Exercise the Pallas kernel (force past the small-input XLA fallback).
    out = positional_encoding_2d(x, pe3, force_pallas=True)
    out = jax.block_until_ready(out)

    # Reference of the forward semantics.
    ref = x + pe[:, :H, :W, :]
    assert out.shape == (B, H, W, dim)
    assert jnp.allclose(out, ref, atol=1e-6, rtol=1e-6)

    # Also verify the small-input XLA fallback path gives the same result.
    out_small = jax.block_until_ready(positional_encoding_2d(x, pe3))
    assert jnp.allclose(out_small, ref, atol=1e-6, rtol=1e-6)

    print("KERNEL_OK")
</pallas_src>

<mosaic_0001>
module attributes {stable_mosaic.version = 11 : i64} {
  func.func @_add_pe_kernel(%arg0: i32, %arg1: memref<2x16x512xf32, #tpu.memory_space<vmem>>, %arg2: memref<1x16x512xf32, #tpu.memory_space<vmem>>, %arg3: memref<2x16x512xf32, #tpu.memory_space<vmem>>) attributes {dimension_semantics = [#tpu.dimension_semantics<parallel>], iteration_bounds = array<i64: 1>, scalar_prefetch = 0 : i64, scratch_operands = 0 : i64, tpu.core_type = #tpu.core_type<tc>, window_params = [{transform_indices = @transform_0, window_bounds = array<i64: 2, 16, 512>}, {transform_indices = @transform_1, window_bounds = array<i64: 1, 16, 512>}, {transform_indices = @transform_2, window_bounds = array<i64: 2, 16, 512>}]} {
    %c0 = arith.constant 0 : index
    %c0_0 = arith.constant 0 : index
    %c0_1 = arith.constant 0 : index
    %0 = vector.load %arg1[%c0, %c0_0, %c0_1] : memref<2x16x512xf32, #tpu.memory_space<vmem>>, vector<2x16x512xf32>
    %c0_2 = arith.constant 0 : index
    %c0_3 = arith.constant 0 : index
    %c0_4 = arith.constant 0 : index
    %1 = vector.load %arg2[%c0_2, %c0_3, %c0_4] : memref<1x16x512xf32, #tpu.memory_space<vmem>>, vector<1x16x512xf32>
    %2 = vector.broadcast %1 : vector<1x16x512xf32> to vector<2x16x512xf32>
    %3 = arith.addf %0, %2 : vector<2x16x512xf32>
    %c0_5 = arith.constant 0 : index
    %c0_6 = arith.constant 0 : index
    %c0_7 = arith.constant 0 : index
    %4 = vector.load %arg3[%c0_5, %c0_6, %c0_7] : memref<2x16x512xf32, #tpu.memory_space<vmem>>, vector<2x16x512xf32>
    tpu.vector_store %arg3[%c0_5, %c0_6, %c0_7], %3 {strides = array<i32>} : memref<2x16x512xf32, #tpu.memory_space<vmem>>, vector<2x16x512xf32>,
    return
  }
  func.func @transform_0(%arg0: i32) -> (i32, i32, i32) {
    %c0_i32 = arith.constant 0 : i32
    %c0_i32_0 = arith.constant 0 : i32
    %c0_i32_1 = arith.constant 0 : i32
    return %c0_i32, %arg0, %c0_i32_0 : i32, i32, i32
  }
  func.func @transform_1(%arg0: i32) -> (i32, i32, i32) {
    %c0_i32 = arith.constant 0 : i32
    %c0_i32_0 = arith.constant 0 : i32
    %c0_i32_1 = arith.constant 0 : i32
    return %c0_i32, %arg0, %c0_i32_0 : i32, i32, i32
  }
  func.func @transform_2(%arg0: i32) -> (i32, i32, i32) {
    %c0_i32 = arith.constant 0 : i32
    %c0_i32_0 = arith.constant 0 : i32
    %c0_i32_1 = arith.constant 0 : i32
    return %c0_i32, %arg0, %c0_i32_0 : i32, i32, i32
  }
}

</mosaic_0001>

<llo_original>
// kernel: positional_encoding_2d.1
$region0: #{positional_encoding_2d.1}
  #allocation0 [shape = 'u32[]', space=smem, size = 0x4, offset = 0x4, fixed_abs, tag = 'smem constant byte address 0x4 - core index']
  #allocation1 [shape = 'u32[144,128]{1,0:T(1,128)}', space=vmem, size = 0x12000, scoped, tag = 'internal scratch']
  %s0 = inlined_call_operand.vmem [shape: f32[2,16,512], index: 0, kind: input, shape index: {}]
  %s1 = inlined_call_operand.vmem [shape: f32[1,16,512], index: 1, kind: input, shape index: {}]
  %s2 = inlined_call_operand.vmem [shape: f32[2,16,512], index: 2, kind: output, shape index: {}]
  %s3 = sld [smem:[#allocation0]]
  $region18: #{positional_encoding_2d.1} parent=0
    _
  %s5 = ssub.s32 1, %s3
  %s6 = scalar_select 0, %s5, %s3
  // Predicated region
  $region2: #{positional_encoding_2d.1} parent=0 // pred_check
    _
  $region3: #{positional_encoding_2d.1} parent=0 // pred_check_branch
    %8 = sbr.rel (0) target = $region5
  $region4: #{positional_encoding_2d.1} parent=0 // pred_region
    _
  $region5: #{positional_encoding_2d.1} parent=0 // pred_fallthru
    _
  // Predicated region
  $region6: #{positional_encoding_2d.1} parent=0 // pred_check
    _
  $region7: #{positional_encoding_2d.1} parent=0 // pred_check_branch
    %10 = sbr.rel (0) target = $region9
  $region8: #{positional_encoding_2d.1} parent=0 // pred_region
    _
  $region9: #{positional_encoding_2d.1} parent=0 // pred_fallthru
    _
  %v11 = vld [vmem:[%s0] sm:$0xff]
  %v12 = vld [vmem:[%s0 + $0x8] sm:$0xff]
  %v13 = vld [vmem:[%s0 + $0x10] sm:$0xff]
  %v14 = vld [vmem:[%s0 + $0x18] sm:$0xff]
  %v15 = vld [vmem:[%s0 + $0x20] sm:$0xff]
  %v16 = vld [vmem:[%s0 + $0x28] sm:$0xff]
  %v17 = vld [vmem:[%s0 + $0x30] sm:$0xff]
  %v18 = vld [vmem:[%s0 + $0x38] sm:$0xff]
  %v19 = vld [vmem:[%s0 + $0x40] sm:$0xff]
  %v20 = vld [vmem:[%s0 + $0x48] sm:$0xff]
  %v21 = vld [vmem:[%s0 + $0x50] sm:$0xff]
  %v22 = vld [vmem:[%s0 + $0x58] sm:$0xff]
  %v23 = vld [vmem:[%s0 + $0x60] sm:$0xff]
  %v24 = vld [vmem:[%s0 + $0x68] sm:$0xff]
  %v25 = vld [vmem:[%s0 + $0x70] sm:$0xff]
  %v26 = vld [vmem:[%s0 + $0x78] sm:$0xff]
  %v27 = vld [vmem:[%s1] sm:$0xff]
  %v28 = vld [vmem:[%s1 + $0x8] sm:$0xff]
  %v29 = vld [vmem:[%s1 + $0x10] sm:$0xff]
  %v30 = vld [vmem:[%s1 + $0x18] sm:$0xff]
  %v31 = vld [vmem:[%s1 + $0x20] sm:$0xff]
  %v32 = vld [vmem:[%s1 + $0x28] sm:$0xff]
  %v33 = vld [vmem:[%s1 + $0x30] sm:$0xff]
  %v34 = vld [vmem:[%s1 + $0x38] sm:$0xff]
  %v35 = vadd.f32 %v11, %v27
  %v36 = vadd.f32 %v12, %v28
  %v37 = vadd.f32 %v13, %v29
  %v38 = vadd.f32 %v14, %v30
  %v39 = vadd.f32 %v15, %v31
  %v40 = vadd.f32 %v16, %v32
  %v41 = vadd.f32 %v17, %v33
  %v42 = vadd.f32 %v18, %v34
  %v43 = vadd.f32 %v19, %v27
  %v44 = vadd.f32 %v20, %v28
  %v45 = vadd.f32 %v21, %v29
  %v46 = vadd.f32 %v22, %v30
  %v47 = vadd.f32 %v23, %v31
  %v48 = vadd.f32 %v24, %v32
  %v49 = vadd.f32 %v25, %v33
  %v50 = vadd.f32 %v26, %v34
  %51 = vst [vmem:[%s2] sm:$0xff] %v35
  %52 = vst [vmem:[%s2 + $0x8] sm:$0xff] %v36
  %53 = vst [vmem:[%s2 + $0x10] sm:$0xff] %v37
  %54 = vst [vmem:[%s2 + $0x18] sm:$0xff] %v38
  %55 = vst [vmem:[%s2 + $0x20] sm:$0xff] %v39
  %56 = vst [vmem:[%s2 + $0x28] sm:$0xff] %v40
  %57 = vst [vmem:[%s2 + $0x30] sm:$0xff] %v41
  %58 = vst [vmem:[%s2 + $0x38] sm:$0xff] %v42
  %59 = vst [vmem:[%s2 + $0x40] sm:$0xff] %v43
  %60 = vst [vmem:[%s2 + $0x48] sm:$0xff] %v44
  %61 = vst [vmem:[%s2 + $0x50] sm:$0xff] %v45
  %62 = vst [vmem:[%s2 + $0x58] sm:$0xff] %v46
  %63 = vst [vmem:[%s2 + $0x60] sm:$0xff] %v47
  %64 = vst [vmem:[%s2 + $0x68] sm:$0xff] %v48
  %65 = vst [vmem:[%s2 + $0x70] sm:$0xff] %v49
  %66 = vst [vmem:[%s2 + $0x78] sm:$0xff] %v50
  // Predicated region
  $region10: #{positional_encoding_2d.1} parent=0 // pred_check
    _
  $region11: #{positional_encoding_2d.1} parent=0 // pred_check_branch
    %68 = sbr.rel (0) target = $region13
  $region12: #{positional_encoding_2d.1} parent=0 // pred_region
    _
  $region13: #{positional_encoding_2d.1} parent=0 // pred_fallthru
    _
  // Predicated region
  $region14: #{positional_encoding_2d.1} parent=0 // pred_check
    _
  $region15: #{positional_encoding_2d.1} parent=0 // pred_check_branch
    %70 = sbr.rel (0) target = $region17
  $region16: #{positional_encoding_2d.1} parent=0 // pred_region
    _
  $region17: #{positional_encoding_2d.1} parent=0 // pred_fallthru
    _

</llo_original>
